<compile_context>
chip_gen: v5e
topology: v5e:2x2
jax: 0.10.0
libtpu: 0.0.40
codegen_flags: <defaults>
</compile_context>

<pallas_src>
import jax
import jax.numpy as jnp
from jax.experimental import pallas as pl
from jax.experimental.pallas import tpu as pltpu


# ---------------------------------------------------------------------------
# Kernels
# ---------------------------------------------------------------------------

def _sub_bands(x_ref):
    """Butterfly: four (C_t, H_t, W) parity planes with the /2 folded in."""
    half = jnp.float32(0.5)
    x1 = x_ref[0, 0].astype(jnp.float32)
    x2 = x_ref[0, 1].astype(jnp.float32)
    x3 = x_ref[0, 2].astype(jnp.float32)
    x4 = x_ref[0, 3].astype(jnp.float32)
    a = (x1 + x3) * half
    b = (x2 + x4) * half
    c = (x1 - x3) * half
    d = (x2 - x4) * half
    p00 = c - d   # even row, even col:  (x1 - x2 - x3 + x4) / 2
    p01 = c + d   # even row, odd  col:  (x1 + x2 - x3 - x4) / 2
    p10 = a - b   # odd  row, even col:  (x1 - x2 + x3 - x4) / 2
    p11 = a + b   # odd  row, odd  col:  (x1 + x2 + x3 + x4) / 2
    return p00, p01, p10, p11


def _interleave_lanes(a, b):
    """(..., W), (..., W) -> (..., 2W) with a in even and b in odd columns."""
    s = a.shape
    return jnp.stack([a, b], axis=-1).reshape(*s[:-1], 2 * s[-1])


def iwt_fused_kernel(x_ref, o_ref):
    """x_ref: (1, 4, C_t, H_t, W) -> o_ref: (1, C_t, H_t, 4W).

    Lane layout of the output block: [row-parity-0 (2W, col-interleaved) |
    row-parity-1 (2W, col-interleaved)]; the wrapper reshape to (2H, 2W) is
    then contiguous (free).
    """
    p00, p01, p10, p11 = _sub_bands(x_ref)
    even = _interleave_lanes(p00, p01)   # output row 2h
    odd = _interleave_lanes(p10, p11)    # output row 2h + 1
    o_ref[0] = jnp.concatenate([even, odd], axis=-1)


def iwt_blocked_kernel(x_ref, o_ref):
    """Fallback kernel: same I/O tiling, planes written blocked
    ([p00|p01|p10|p11] along the 4W lane dim); the column interleave is
    finished by one XLA transpose in the wrapper."""
    p00, p01, p10, p11 = _sub_bands(x_ref)
    o_ref[0] = jnp.concatenate([p00, p01, p10, p11], axis=-1)


# ---------------------------------------------------------------------------
# Tiling + pallas_call wrapper
# ---------------------------------------------------------------------------

def _divisors(n):
    return [d for d in range(1, n + 1) if n % d == 0]


def _pick_tiles(C, H, W, budget_bytes=16 * 1024 * 1024):
    """Pick (C_t, H_t) so double-buffered in+out blocks stay under budget.

    Per grid step (f32): in block = 4*C_t*H_t*W, out block = C_t*H_t*4W
    -> double-buffered total ~= 64 * C_t*H_t*W bytes.
    """
    max_elems = max(budget_bytes // 64, W)
    # second-to-last block dim must be a multiple of 8 or the full extent
    valid_h = [h for h in _divisors(H) if h % 8 == 0] or [H]
    h_fit = [h for h in valid_h if h * W <= max_elems]
    H_t = max(h_fit) if h_fit else min(valid_h)
    c_fit = [c for c in _divisors(C) if c * H_t * W <= max_elems]
    C_t = max(c_fit) if c_fit else 1
    return C_t, H_t


def _iwt_pallas(x5, kernel, C_t, H_t, vmem_limit_bytes=32 * 1024 * 1024):
    B, _, C, H, W = x5.shape
    grid = (B, C // C_t, H // H_t)
    return pl.pallas_call(
        kernel,
        out_shape=jax.ShapeDtypeStruct((B, C, H, 4 * W), jnp.float32),
        grid=grid,
        in_specs=[pl.BlockSpec((1, 4, C_t, H_t, W),
                               lambda b, ci, hi: (b, 0, ci, hi, 0))],
        out_specs=pl.BlockSpec((1, C_t, H_t, 4 * W),
                               lambda b, ci, hi: (b, ci, hi, 0)),
        compiler_params=pltpu.CompilerParams(
            dimension_semantics=("parallel", "parallel", "parallel"),
            vmem_limit_bytes=vmem_limit_bytes),
    )(x5)


# ---------------------------------------------------------------------------
# Public wrapper (with one-time probe for the fused lane interleave)
# ---------------------------------------------------------------------------

_FUSED_OK = None


def _fused_interleave_supported():
    """Check once, on a tiny probe, that the fused interleave kernel both
    lowers on this Mosaic/TPU version and matches the reference numerics."""
    global _FUSED_OK
    if _FUSED_OK is None:
        try:
            xp = jax.random.normal(jax.random.PRNGKey(1), (1, 8, 8, 8),
                                   dtype=jnp.float32)
            got = _iwt_pallas(xp.reshape(1, 4, 2, 8, 8), iwt_fused_kernel, 2, 8)
            got = got.reshape(1, 2, 16, 16)
            _FUSED_OK = bool(jnp.allclose(got, iwt_ref(xp),
                                          atol=1e-5, rtol=1e-5))
        except Exception:
            _FUSED_OK = False
    return _FUSED_OK


def iwt(x):
    """Pallas IWT: x (B, 4C, H, W) -> (B, C, 2H, 2W) float32."""
    B, C4, H, W = x.shape
    assert C4 % 4 == 0, "input channel count must be divisible by 4"
    C = C4 // 4
    # Contiguous (free) split of the channel dim into (sub-band, channel).
    x5 = x.reshape(B, 4, C, H, W)
    C_t, H_t = _pick_tiles(C, H, W)

    if _fused_interleave_supported():
        try:
            out4 = _iwt_pallas(x5, iwt_fused_kernel, C_t, H_t)
            # (B, C, H, 4W) -> (B, C, 2H, 2W): contiguous reshape, no HBM pass.
            return out4.reshape(B, C, 2 * H, 2 * W)
        except Exception:
            pass  # e.g. tile-size-dependent lowering failure -> fallback below

    # TODO(synk): fallback when the in-kernel lane interleave does not lower on
    # this Mosaic version; the column interleave is finished with one XLA
    # transpose pass over the output.
    out4 = _iwt_pallas(x5, iwt_blocked_kernel, C_t, H_t)
    h = out4.reshape(B, C, H, 2, 2, W)          # (b, c, h, rp, cp, w)
    h = jnp.transpose(h, (0, 1, 2, 3, 5, 4))    # (b, c, h, rp, w, cp)
    return h.reshape(B, C, 2 * H, 2 * W)


def iwt_ref(x):
    """Pure-JAX reference matching iwt_init exactly."""
    x = x.astype(jnp.float32)
    B, C4, H, W = x.shape
    C = C4 // 4
    x1 = x[:, 0 * C:1 * C] / 2
    x2 = x[:, 1 * C:2 * C] / 2
    x3 = x[:, 2 * C:3 * C] / 2
    x4 = x[:, 3 * C:4 * C] / 2
    h = jnp.zeros((B, C, 2 * H, 2 * W), jnp.float32)
    h = h.at[:, :, 0::2, 0::2].set(x1 - x2 - x3 + x4)
    h = h.at[:, :, 1::2, 0::2].set(x1 - x2 + x3 - x4)
    h = h.at[:, :, 0::2, 1::2].set(x1 + x2 - x3 - x4)
    h = h.at[:, :, 1::2, 1::2].set(x1 + x2 + x3 + x4)
    return h


if __name__ == "__main__":
    key = jax.random.PRNGKey(0)
    # Small shapes: B=2, in_channels=16 (-> out_channels=4), H=W=16 (-> 32x32)
    x = jax.random.normal(key, (2, 16, 16, 16), dtype=jnp.float32)

    out = iwt(x)
    out = jax.block_until_ready(out)

    ref = iwt_ref(x)
    assert out.shape == (2, 4, 32, 32), out.shape
    assert jnp.allclose(out, ref, atol=1e-5, rtol=1e-5), "mismatch vs reference"

    print("KERNEL_OK")
</pallas_src>

<mosaic_0001>
module attributes {stable_mosaic.version = 11 : i64} {
  func.func @iwt_fused_kernel(%arg0: i32, %arg1: i32, %arg2: i32, %arg3: memref<1x4x2x8x8xf32, #tpu.memory_space<vmem>>, %arg4: memref<1x2x8x32xf32, #tpu.memory_space<vmem>>) attributes {dimension_semantics = [#tpu.dimension_semantics<parallel>, #tpu.dimension_semantics<parallel>, #tpu.dimension_semantics<parallel>], iteration_bounds = array<i64: 1, 1, 1>, scalar_prefetch = 0 : i64, scratch_operands = 0 : i64, tpu.core_type = #tpu.core_type<tc>, window_params = [{transform_indices = @transform_0, window_bounds = array<i64: 1, 4, 2, 8, 8>}, {transform_indices = @transform_1, window_bounds = array<i64: 1, 2, 8, 32>}]} {
    %c0 = arith.constant 0 : index
    %c0_0 = arith.constant 0 : index
    %c0_1 = arith.constant 0 : index
    %c0_2 = arith.constant 0 : index
    %c0_3 = arith.constant 0 : index
    %0 = vector.load %arg3[%c0, %c0_0, %c0_1, %c0_2, %c0_3] : memref<1x4x2x8x8xf32, #tpu.memory_space<vmem>>, vector<1x1x2x8x8xf32>
    %1 = vector.shape_cast %0 : vector<1x1x2x8x8xf32> to vector<2x8x8xf32>
    %c0_4 = arith.constant 0 : index
    %c1 = arith.constant 1 : index
    %c0_5 = arith.constant 0 : index
    %c0_6 = arith.constant 0 : index
    %c0_7 = arith.constant 0 : index
    %2 = vector.load %arg3[%c0_4, %c1, %c0_5, %c0_6, %c0_7] : memref<1x4x2x8x8xf32, #tpu.memory_space<vmem>>, vector<1x1x2x8x8xf32>
    %3 = vector.shape_cast %2 : vector<1x1x2x8x8xf32> to vector<2x8x8xf32>
    %c0_8 = arith.constant 0 : index
    %c2 = arith.constant 2 : index
    %c0_9 = arith.constant 0 : index
    %c0_10 = arith.constant 0 : index
    %c0_11 = arith.constant 0 : index
    %4 = vector.load %arg3[%c0_8, %c2, %c0_9, %c0_10, %c0_11] : memref<1x4x2x8x8xf32, #tpu.memory_space<vmem>>, vector<1x1x2x8x8xf32>
    %5 = vector.shape_cast %4 : vector<1x1x2x8x8xf32> to vector<2x8x8xf32>
    %c0_12 = arith.constant 0 : index
    %c3 = arith.constant 3 : index
    %c0_13 = arith.constant 0 : index
    %c0_14 = arith.constant 0 : index
    %c0_15 = arith.constant 0 : index
    %6 = vector.load %arg3[%c0_12, %c3, %c0_13, %c0_14, %c0_15] : memref<1x4x2x8x8xf32, #tpu.memory_space<vmem>>, vector<1x1x2x8x8xf32>
    %7 = vector.shape_cast %6 : vector<1x1x2x8x8xf32> to vector<2x8x8xf32>
    %8 = arith.addf %1, %5 : vector<2x8x8xf32>
    %cst = arith.constant 5.000000e-01 : f32
    %9 = vector.broadcast %cst : f32 to vector<2x8x8xf32>
    %10 = arith.mulf %8, %9 : vector<2x8x8xf32>
    %11 = arith.addf %3, %7 : vector<2x8x8xf32>
    %cst_16 = arith.constant 5.000000e-01 : f32
    %12 = vector.broadcast %cst_16 : f32 to vector<2x8x8xf32>
    %13 = arith.mulf %11, %12 : vector<2x8x8xf32>
    %14 = arith.subf %1, %5 : vector<2x8x8xf32>
    %cst_17 = arith.constant 5.000000e-01 : f32
    %15 = vector.broadcast %cst_17 : f32 to vector<2x8x8xf32>
    %16 = arith.mulf %14, %15 : vector<2x8x8xf32>
    %17 = arith.subf %3, %7 : vector<2x8x8xf32>
    %cst_18 = arith.constant 5.000000e-01 : f32
    %18 = vector.broadcast %cst_18 : f32 to vector<2x8x8xf32>
    %19 = arith.mulf %17, %18 : vector<2x8x8xf32>
    %20 = arith.subf %16, %19 : vector<2x8x8xf32>
    %21 = arith.addf %16, %19 : vector<2x8x8xf32>
    %22 = arith.subf %10, %13 : vector<2x8x8xf32>
    %23 = arith.addf %10, %13 : vector<2x8x8xf32>
    %24 = vector.shape_cast %20 : vector<2x8x8xf32> to vector<2x8x8x1xf32>
    %25 = vector.shape_cast %21 : vector<2x8x8xf32> to vector<2x8x8x1xf32>
    %26 = tpu.concatenate %24, %25 in 3 : vector<2x8x8x1xf32>, vector<2x8x8x1xf32> -> vector<2x8x8x2xf32>
    %27 = vector.shape_cast %26 : vector<2x8x8x2xf32> to vector<2x8x16xf32>
    %28 = vector.shape_cast %22 : vector<2x8x8xf32> to vector<2x8x8x1xf32>
    %29 = vector.shape_cast %23 : vector<2x8x8xf32> to vector<2x8x8x1xf32>
    %30 = tpu.concatenate %28, %29 in 3 : vector<2x8x8x1xf32>, vector<2x8x8x1xf32> -> vector<2x8x8x2xf32>
    %31 = vector.shape_cast %30 : vector<2x8x8x2xf32> to vector<2x8x16xf32>
    %32 = tpu.concatenate %27, %31 in 2 : vector<2x8x16xf32>, vector<2x8x16xf32> -> vector<2x8x32xf32>
    %c0_19 = arith.constant 0 : index
    %c0_20 = arith.constant 0 : index
    %c0_21 = arith.constant 0 : index
    %c0_22 = arith.constant 0 : index
    %33 = vector.load %arg4[%c0_19, %c0_20, %c0_21, %c0_22] : memref<1x2x8x32xf32, #tpu.memory_space<vmem>>, vector<1x2x8x32xf32>
    %34 = vector.shape_cast %33 : vector<1x2x8x32xf32> to vector<2x8x32xf32>
    %35 = vector.shape_cast %32 : vector<2x8x32xf32> to vector<1x2x8x32xf32>
    tpu.vector_store %arg4[%c0_19, %c0_20, %c0_21, %c0_22], %35 {strides = array<i32>} : memref<1x2x8x32xf32, #tpu.memory_space<vmem>>, vector<1x2x8x32xf32>,
    return
  }
  func.func @transform_0(%arg0: i32, %arg1: i32, %arg2: i32) -> (i32, i32, i32, i32, i32) {
    %c0_i32 = arith.constant 0 : i32
    %c0_i32_0 = arith.constant 0 : i32
    %c0_i32_1 = arith.constant 0 : i32
    return %arg0, %c0_i32, %arg1, %arg2, %c0_i32_0 : i32, i32, i32, i32, i32
  }
  func.func @transform_1(%arg0: i32, %arg1: i32, %arg2: i32) -> (i32, i32, i32, i32) {
    %c0_i32 = arith.constant 0 : i32
    %c0_i32_0 = arith.constant 0 : i32
    return %arg0, %arg1, %arg2, %c0_i32 : i32, i32, i32, i32
  }
}

module attributes {stable_mosaic.version = 11 : i64} {
  func.func @iwt_blocked_kernel(%arg0: i32, %arg1: i32, %arg2: i32, %arg3: memref<1x4x4x16x16xf32, #tpu.memory_space<vmem>>, %arg4: memref<1x4x16x64xf32, #tpu.memory_space<vmem>>) attributes {dimension_semantics = [#tpu.dimension_semantics<parallel>, #tpu.dimension_semantics<parallel>, #tpu.dimension_semantics<parallel>], iteration_bounds = array<i64: 2, 1, 1>, scalar_prefetch = 0 : i64, scratch_operands = 0 : i64, tpu.core_type = #tpu.core_type<tc>, window_params = [{transform_indices = @transform_0, window_bounds = array<i64: 1, 4, 4, 16, 16>}, {transform_indices = @transform_1, window_bounds = array<i64: 1, 4, 16, 64>}]} {
    %c0 = arith.constant 0 : index
    %c0_0 = arith.constant 0 : index
    %c0_1 = arith.constant 0 : index
    %c0_2 = arith.constant 0 : index
    %c0_3 = arith.constant 0 : index
    %0 = vector.load %arg3[%c0, %c0_0, %c0_1, %c0_2, %c0_3] : memref<1x4x4x16x16xf32, #tpu.memory_space<vmem>>, vector<1x1x4x16x16xf32>
    %1 = vector.shape_cast %0 : vector<1x1x4x16x16xf32> to vector<4x16x16xf32>
    %c0_4 = arith.constant 0 : index
    %c1 = arith.constant 1 : index
    %c0_5 = arith.constant 0 : index
    %c0_6 = arith.constant 0 : index
    %c0_7 = arith.constant 0 : index
    %2 = vector.load %arg3[%c0_4, %c1, %c0_5, %c0_6, %c0_7] : memref<1x4x4x16x16xf32, #tpu.memory_space<vmem>>, vector<1x1x4x16x16xf32>
    %3 = vector.shape_cast %2 : vector<1x1x4x16x16xf32> to vector<4x16x16xf32>
    %c0_8 = arith.constant 0 : index
    %c2 = arith.constant 2 : index
    %c0_9 = arith.constant 0 : index
    %c0_10 = arith.constant 0 : index
    %c0_11 = arith.constant 0 : index
    %4 = vector.load %arg3[%c0_8, %c2, %c0_9, %c0_10, %c0_11] : memref<1x4x4x16x16xf32, #tpu.memory_space<vmem>>, vector<1x1x4x16x16xf32>
    %5 = vector.shape_cast %4 : vector<1x1x4x16x16xf32> to vector<4x16x16xf32>
    %c0_12 = arith.constant 0 : index
    %c3 = arith.constant 3 : index
    %c0_13 = arith.constant 0 : index
    %c0_14 = arith.constant 0 : index
    %c0_15 = arith.constant 0 : index
    %6 = vector.load %arg3[%c0_12, %c3, %c0_13, %c0_14, %c0_15] : memref<1x4x4x16x16xf32, #tpu.memory_space<vmem>>, vector<1x1x4x16x16xf32>
    %7 = vector.shape_cast %6 : vector<1x1x4x16x16xf32> to vector<4x16x16xf32>
    %8 = arith.addf %1, %5 : vector<4x16x16xf32>
    %cst = arith.constant 5.000000e-01 : f32
    %9 = vector.broadcast %cst : f32 to vector<4x16x16xf32>
    %10 = arith.mulf %8, %9 : vector<4x16x16xf32>
    %11 = arith.addf %3, %7 : vector<4x16x16xf32>
    %cst_16 = arith.constant 5.000000e-01 : f32
    %12 = vector.broadcast %cst_16 : f32 to vector<4x16x16xf32>
    %13 = arith.mulf %11, %12 : vector<4x16x16xf32>
    %14 = arith.subf %1, %5 : vector<4x16x16xf32>
    %cst_17 = arith.constant 5.000000e-01 : f32
    %15 = vector.broadcast %cst_17 : f32 to vector<4x16x16xf32>
    %16 = arith.mulf %14, %15 : vector<4x16x16xf32>
    %17 = arith.subf %3, %7 : vector<4x16x16xf32>
    %cst_18 = arith.constant 5.000000e-01 : f32
    %18 = vector.broadcast %cst_18 : f32 to vector<4x16x16xf32>
    %19 = arith.mulf %17, %18 : vector<4x16x16xf32>
    %20 = arith.subf %16, %19 : vector<4x16x16xf32>
    %21 = arith.addf %16, %19 : vector<4x16x16xf32>
    %22 = arith.subf %10, %13 : vector<4x16x16xf32>
    %23 = arith.addf %10, %13 : vector<4x16x16xf32>
    %24 = tpu.concatenate %20, %21, %22, %23 in 2 : vector<4x16x16xf32>, vector<4x16x16xf32>, vector<4x16x16xf32>, vector<4x16x16xf32> -> vector<4x16x64xf32>
    %c0_19 = arith.constant 0 : index
    %c0_20 = arith.constant 0 : index
    %c0_21 = arith.constant 0 : index
    %c0_22 = arith.constant 0 : index
    %25 = vector.load %arg4[%c0_19, %c0_20, %c0_21, %c0_22] : memref<1x4x16x64xf32, #tpu.memory_space<vmem>>, vector<1x4x16x64xf32>
    %26 = vector.shape_cast %25 : vector<1x4x16x64xf32> to vector<4x16x64xf32>
    %27 = vector.shape_cast %24 : vector<4x16x64xf32> to vector<1x4x16x64xf32>
    tpu.vector_store %arg4[%c0_19, %c0_20, %c0_21, %c0_22], %27 {strides = array<i32>} : memref<1x4x16x64xf32, #tpu.memory_space<vmem>>, vector<1x4x16x64xf32>,
    return
  }
  func.func @transform_0(%arg0: i32, %arg1: i32, %arg2: i32) -> (i32, i32, i32, i32, i32) {
    %c0_i32 = arith.constant 0 : i32
    %c0_i32_0 = arith.constant 0 : i32
    %c0_i32_1 = arith.constant 0 : i32
    return %arg0, %c0_i32, %arg1, %arg2, %c0_i32_0 : i32, i32, i32, i32, i32
  }
  func.func @transform_1(%arg0: i32, %arg1: i32, %arg2: i32) -> (i32, i32, i32, i32) {
    %c0_i32 = arith.constant 0 : i32
    %c0_i32_0 = arith.constant 0 : i32
    return %arg0, %arg1, %arg2, %c0_i32 : i32, i32, i32, i32
  }
}

</mosaic_0001>

<llo_original>
// kernel: tpu_custom_call.1
$region0: #{tpu_custom_call.1}
  #allocation0 [shape = 'u32[]', space=smem, size = 0x4, offset = 0x4, fixed_abs, tag = 'smem constant byte address 0x4 - core index']
  #allocation1 [shape = 'u32[72,128]{1,0:T(1,128)}', space=vmem, size = 0x9000, scoped, tag = 'internal scratch']
  %s0 = inlined_call_operand.hbm [shape: f32[1,4,2,8,8], index: 0, kind: input, shape index: {}]
  %s1 = inlined_call_operand.hbm [shape: f32[1,2,8,32], index: 1, kind: output, shape index: {}]
  %s2 = sld [smem:[#allocation0]]
  $region18: #{tpu_custom_call.1} parent=0
    _
  %s4 = ssub.s32 1, %s2
  %s5 = scalar_select 0, %s4, %s2
  $region1: #{tpu_custom_call.1} parent=0
    #allocation2 [shape = 'u8[32768]{0}', space=vmem, size = 0x8000, scoped, tag = 'input window, operand 0, single buffered']
    #allocation3 [shape = 's32[1]{0}', space=sflag, size = 0x4, scoped, tag = 'scoped memory for tpu_custom_call.1']
    #allocation4 [shape = 's32[1]{0}', space=sflag, size = 0x4, scoped, tag = 'scoped memory for tpu_custom_call.1']
    #allocation5 [shape = 'u8[8192]{0}', space=vmem, size = 0x2000, scoped, tag = 'output window, operand 0, single buffered']
    %6 = vsyncpa [#allocation3], 0
    %7 = vsyncpa [#allocation4], 0
    // Predicated region
    $region2: #{tpu_custom_call.1} parent=1 // pred_check
      _
    $region3: #{tpu_custom_call.1} parent=1 // pred_check_branch
      %9 = sbr.rel (0) target = $region5
    $region4: #{tpu_custom_call.1} parent=1 // pred_region
      %11 = vsyncadd [#allocation3], 0
      %s12 = sshll.u32 %s0, 4
      %s13 = int_to_ptr.hbm [resolvable:$true] %s12
      %s14 = sshll.u32 [#allocation2], 4
      %s15 = int_to_ptr.vmem [resolvable:$true] %s14
      %20 = dma.hbm_to_vmem [thread:$0]  %s13, 1024, %s15, [#allocation3], 128, 128, 8
    $region5: #{tpu_custom_call.1} parent=1 // pred_fallthru
      _
    // Predicated region
    $region6: #{tpu_custom_call.1} parent=1 // pred_check
      _
    $region7: #{tpu_custom_call.1} parent=1 // pred_check_branch
      %22 = sbr.rel (0) target = $region9
    $region8: #{tpu_custom_call.1} parent=1 // pred_region
      %24 = dma.done [#allocation3], 1024
    $region9: #{tpu_custom_call.1} parent=1 // pred_fallthru
      _
    %v25 = vld [vmem:[#allocation2] sm:$0xff]
    %v26 = vld [vmem:[#allocation2 + $0x8] sm:$0xff]
    %s27 = scalar_lea.vmem [#allocation2], 16
    %v28 = vld [vmem:[%s27] sm:$0xff]
    %v29 = vld [vmem:[%s27 + $0x8] sm:$0xff]
    %s30 = scalar_lea.vmem [#allocation2], 32
    %v31 = vld [vmem:[%s30] sm:$0xff]
    %v32 = vld [vmem:[%s30 + $0x8] sm:$0xff]
    %s33 = scalar_lea.vmem [#allocation2], 48
    %v34 = vld [vmem:[%s33] sm:$0xff]
    %v35 = vld [vmem:[%s33 + $0x8] sm:$0xff]
    %v36 = vadd.f32 %v25, %v31
    %v37 = vadd.f32 %v26, %v32
    %v38 = vmul.f32 %v36, 0.5
    %v39 = vmul.f32 %v37, 0.5
    %v40 = vadd.f32 %v28, %v34
    %v41 = vadd.f32 %v29, %v35
    %v42 = vmul.f32 %v40, 0.5
    %v43 = vmul.f32 %v41, 0.5
    %v44 = vsub.f32 %v25, %v31
    %v45 = vsub.f32 %v26, %v32
    %v46 = vmul.f32 %v44, 0.5
    %v47 = vmul.f32 %v45, 0.5
    %v48 = vsub.f32 %v28, %v34
    %v49 = vsub.f32 %v29, %v35
    %v50 = vmul.f32 %v48, 0.5
    %v51 = vmul.f32 %v49, 0.5
    %v52 = vsub.f32 %v46, %v50
    %v53 = vsub.f32 %v47, %v51
    %v54 = vadd.f32 %v46, %v50
    %v55 = vadd.f32 %v47, %v51
    %v56 = vsub.f32 %v38, %v42
    %v57 = vsub.f32 %v39, %v43
    %v58 = vadd.f32 %v38, %v42
    %v59 = vadd.f32 %v39, %v43
    %v60 = vperm.slane %v52, 0
    %v61 = vlaneseq
    %v62 = vshrl.u32 %v61, 7
    %64 = vset.pattern.permute.xlu0 %v62
    %65 = vperm.xlu0 %64, %v60
    %v66 = vpop.permute.xlu0 %65
    %v67 = vperm.slane %v52, 1
    %v68 = vlaneseq
    %v69 = vshrl.u32 %v68, 7
    %71 = vset.pattern.permute.xlu0 %v69
    %72 = vperm.xlu0 %71, %v67
    %v73 = vpop.permute.xlu0 %72
    %v74 = vperm.slane %v52, 2
    %v75 = vlaneseq
    %v76 = vshrl.u32 %v75, 7
    %78 = vset.pattern.permute.xlu0 %v76
    %79 = vperm.xlu0 %78, %v74
    %v80 = vpop.permute.xlu0 %79
    %v81 = vperm.slane %v52, 3
    %v82 = vlaneseq
    %v83 = vshrl.u32 %v82, 7
    %85 = vset.pattern.permute.xlu0 %v83
    %86 = vperm.xlu0 %85, %v81
    %v87 = vpop.permute.xlu0 %86
    %v88 = vperm.slane %v52, 4
    %v89 = vlaneseq
    %v90 = vshrl.u32 %v89, 7
    %92 = vset.pattern.permute.xlu0 %v90
    %93 = vperm.xlu0 %92, %v88
    %v94 = vpop.permute.xlu0 %93
    %v95 = vperm.slane %v52, 5
    %v96 = vlaneseq
    %v97 = vshrl.u32 %v96, 7
    %99 = vset.pattern.permute.xlu0 %v97
    %100 = vperm.xlu0 %99, %v95
    %v101 = vpop.permute.xlu0 %100
    %v102 = vperm.slane %v52, 6
    %v103 = vlaneseq
    %v104 = vshrl.u32 %v103, 7
    %106 = vset.pattern.permute.xlu0 %v104
    %107 = vperm.xlu0 %106, %v102
    %v108 = vpop.permute.xlu0 %107
    %v109 = vperm.slane %v52, 7
    %v110 = vlaneseq
    %v111 = vshrl.u32 %v110, 7
    %113 = vset.pattern.permute.xlu0 %v111
    %114 = vperm.xlu0 %113, %v109
    %v115 = vpop.permute.xlu0 %114
    %v116 = vperm.slane %v53, 0
    %v117 = vlaneseq
    %v118 = vshrl.u32 %v117, 7
    %120 = vset.pattern.permute.xlu0 %v118
    %121 = vperm.xlu0 %120, %v116
    %v122 = vpop.permute.xlu0 %121
    %v123 = vperm.slane %v53, 1
    %v124 = vlaneseq
    %v125 = vshrl.u32 %v124, 7
    %127 = vset.pattern.permute.xlu0 %v125
    %128 = vperm.xlu0 %127, %v123
    %v129 = vpop.permute.xlu0 %128
    %v130 = vperm.slane %v53, 2
    %v131 = vlaneseq
    %v132 = vshrl.u32 %v131, 7
    %134 = vset.pattern.permute.xlu0 %v132
    %135 = vperm.xlu0 %134, %v130
    %v136 = vpop.permute.xlu0 %135
    %v137 = vperm.slane %v53, 3
    %v138 = vlaneseq
    %v139 = vshrl.u32 %v138, 7
    %141 = vset.pattern.permute.xlu0 %v139
    %142 = vperm.xlu0 %141, %v137
    %v143 = vpop.permute.xlu0 %142
    %v144 = vperm.slane %v53, 4
    %v145 = vlaneseq
    %v146 = vshrl.u32 %v145, 7
    %148 = vset.pattern.permute.xlu0 %v146
    %149 = vperm.xlu0 %148, %v144
    %v150 = vpop.permute.xlu0 %149
    %v151 = vperm.slane %v53, 5
    %v152 = vlaneseq
    %v153 = vshrl.u32 %v152, 7
    %155 = vset.pattern.permute.xlu0 %v153
    %156 = vperm.xlu0 %155, %v151
    %v157 = vpop.permute.xlu0 %156
    %v158 = vperm.slane %v53, 6
    %v159 = vlaneseq
    %v160 = vshrl.u32 %v159, 7
    %162 = vset.pattern.permute.xlu0 %v160
    %163 = vperm.xlu0 %162, %v158
    %v164 = vpop.permute.xlu0 %163
    %v165 = vperm.slane %v53, 7
    %v166 = vlaneseq
    %v167 = vshrl.u32 %v166, 7
    %169 = vset.pattern.permute.xlu0 %v167
    %170 = vperm.xlu0 %169, %v165
    %v171 = vpop.permute.xlu0 %170
    %v172 = vperm.slane %v54, 0
    %v173 = vlaneseq
    %v174 = vshrl.u32 %v173, 7
    %176 = vset.pattern.permute.xlu0 %v174
    %177 = vperm.xlu0 %176, %v172
    %v178 = vpop.permute.xlu0 %177
    %v179 = vperm.slane %v54, 1
    %v180 = vlaneseq
    %v181 = vshrl.u32 %v180, 7
    %183 = vset.pattern.permute.xlu0 %v181
    %184 = vperm.xlu0 %183, %v179
    %v185 = vpop.permute.xlu0 %184
    %v186 = vperm.slane %v54, 2
    %v187 = vlaneseq
    %v188 = vshrl.u32 %v187, 7
    %190 = vset.pattern.permute.xlu0 %v188
    %191 = vperm.xlu0 %190, %v186
    %v192 = vpop.permute.xlu0 %191
    %v193 = vperm.slane %v54, 3
    %v194 = vlaneseq
    %v195 = vshrl.u32 %v194, 7
    %197 = vset.pattern.permute.xlu0 %v195
    %198 = vperm.xlu0 %197, %v193
    %v199 = vpop.permute.xlu0 %198
    %v200 = vperm.slane %v54, 4
    %v201 = vlaneseq
    %v202 = vshrl.u32 %v201, 7
    %204 = vset.pattern.permute.xlu0 %v202
    %205 = vperm.xlu0 %204, %v200
    %v206 = vpop.permute.xlu0 %205
    %v207 = vperm.slane %v54, 5
    %v208 = vlaneseq
    %v209 = vshrl.u32 %v208, 7
    %211 = vset.pattern.permute.xlu0 %v209
    %212 = vperm.xlu0 %211, %v207
    %v213 = vpop.permute.xlu0 %212
    %v214 = vperm.slane %v54, 6
    %v215 = vlaneseq
    %v216 = vshrl.u32 %v215, 7
    %218 = vset.pattern.permute.xlu0 %v216
    %219 = vperm.xlu0 %218, %v214
    %v220 = vpop.permute.xlu0 %219
    %v221 = vperm.slane %v54, 7
    %v222 = vlaneseq
    %v223 = vshrl.u32 %v222, 7
    %225 = vset.pattern.permute.xlu0 %v223
    %226 = vperm.xlu0 %225, %v221
    %v227 = vpop.permute.xlu0 %226
    %v228 = vperm.slane %v55, 0
    %v229 = vlaneseq
    %v230 = vshrl.u32 %v229, 7
    %232 = vset.pattern.permute.xlu0 %v230
    %233 = vperm.xlu0 %232, %v228
    %v234 = vpop.permute.xlu0 %233
    %v235 = vperm.slane %v55, 1
    %v236 = vlaneseq
    %v237 = vshrl.u32 %v236, 7
    %239 = vset.pattern.permute.xlu0 %v237
    %240 = vperm.xlu0 %239, %v235
    %v241 = vpop.permute.xlu0 %240
    %v242 = vperm.slane %v55, 2
    %v243 = vlaneseq
    %v244 = vshrl.u32 %v243, 7
    %246 = vset.pattern.permute.xlu0 %v244
    %247 = vperm.xlu0 %246, %v242
    %v248 = vpop.permute.xlu0 %247
    %v249 = vperm.slane %v55, 3
    %v250 = vlaneseq
    %v251 = vshrl.u32 %v250, 7
    %253 = vset.pattern.permute.xlu0 %v251
    %254 = vperm.xlu0 %253, %v249
    %v255 = vpop.permute.xlu0 %254
    %v256 = vperm.slane %v55, 4
    %v257 = vlaneseq
    %v258 = vshrl.u32 %v257, 7
    %260 = vset.pattern.permute.xlu0 %v258
    %261 = vperm.xlu0 %260, %v256
    %v262 = vpop.permute.xlu0 %261
    %v263 = vperm.slane %v55, 5
    %v264 = vlaneseq
    %v265 = vshrl.u32 %v264, 7
    %267 = vset.pattern.permute.xlu0 %v265
    %268 = vperm.xlu0 %267, %v263
    %v269 = vpop.permute.xlu0 %268
    %v270 = vperm.slane %v55, 6
    %v271 = vlaneseq
    %v272 = vshrl.u32 %v271, 7
    %274 = vset.pattern.permute.xlu0 %v272
    %275 = vperm.xlu0 %274, %v270
    %v276 = vpop.permute.xlu0 %275
    %v277 = vperm.slane %v55, 7
    %v278 = vlaneseq
    %v279 = vshrl.u32 %v278, 7
    %281 = vset.pattern.permute.xlu0 %v279
    %282 = vperm.xlu0 %281, %v277
    %v283 = vpop.permute.xlu0 %282
    %vm284 = vcmask 7168
    %v285 = vsel %vm284, %v66, %v178
    %v286 = vsel %vm284, %v73, %v185
    %v287 = vsel %vm284, %v80, %v192
    %v288 = vsel %vm284, %v87, %v199
    %v289 = vsel %vm284, %v94, %v206
    %v290 = vsel %vm284, %v101, %v213
    %v291 = vsel %vm284, %v108, %v220
    %v292 = vsel %vm284, %v115, %v227
    %v293 = vsel %vm284, %v122, %v234
    %v294 = vsel %vm284, %v129, %v241
    %v295 = vsel %vm284, %v136, %v248
    %v296 = vsel %vm284, %v143, %v255
    %v297 = vsel %vm284, %v150, %v262
    %v298 = vsel %vm284, %v157, %v269
    %v299 = vsel %vm284, %v164, %v276
    %v300 = vsel %vm284, %v171, %v283
    %v301 = vrot.slane %v287, 4
    %vm302 = vcmask 1047556
    %v303 = vsel %vm302, %v301, %v285
    %v304 = vrot.slane %v285, 4
    %v305 = vsel %vm302, %v287, %v304
    %v307 = vunpack.c.l.s4 1983009808
    %v308 = vunpack.c.0.s8 %v307
    %v309 = vperm.slane %v303, %v308
    %v311 = vunpack.c.l.s4 1983009808
    %v312 = vunpack.c.0.s8 %v311
    %v313 = vperm.slane %v305, %v312
    %v314 = vrot.slane %v288, 4
    %v315 = vsel %vm302, %v314, %v286
    %v316 = vrot.slane %v286, 4
    %v317 = vsel %vm302, %v288, %v316
    %v319 = vunpack.c.l.s4 1983009808
    %v320 = vunpack.c.0.s8 %v319
    %v321 = vperm.slane %v315, %v320
    %v323 = vunpack.c.l.s4 1983009808
    %v324 = vunpack.c.0.s8 %v323
    %v325 = vperm.slane %v317, %v324
    %v326 = vrot.slane %v291, 4
    %v327 = vsel %vm302, %v326, %v289
    %v328 = vrot.slane %v289, 4
    %v329 = vsel %vm302, %v291, %v328
    %v331 = vunpack.c.l.s4 1983009808
    %v332 = vunpack.c.0.s8 %v331
    %v333 = vperm.slane %v327, %v332
    %v335 = vunpack.c.l.s4 1983009808
    %v336 = vunpack.c.0.s8 %v335
    %v337 = vperm.slane %v329, %v336
    %v338 = vrot.slane %v292, 4
    %v339 = vsel %vm302, %v338, %v290
    %v340 = vrot.slane %v290, 4
    %v341 = vsel %vm302, %v292, %v340
    %v343 = vunpack.c.l.s4 1983009808
    %v344 = vunpack.c.0.s8 %v343
    %v345 = vperm.slane %v339, %v344
    %v347 = vunpack.c.l.s4 1983009808
    %v348 = vunpack.c.0.s8 %v347
    %v349 = vperm.slane %v341, %v348
    %v350 = vrot.slane %v321, 4
    %v351 = vsel %vm302, %v350, %v309
    %v352 = vrot.slane %v309, 4
    %v353 = vsel %vm302, %v321, %v352
    %v355 = vunpack.c.l.s4 1934713408
    %v356 = vunpack.c.0.s8 %v355
    %v357 = vperm.slane %v351, %v356
    %v359 = vunpack.c.l.s4 1934713408
    %v360 = vunpack.c.0.s8 %v359
    %v361 = vperm.slane %v353, %v360
    %v362 = vrot.slane %v325, 4
    %v363 = vsel %vm302, %v362, %v313
    %v364 = vrot.slane %v313, 4
    %v365 = vsel %vm302, %v325, %v364
    %v367 = vunpack.c.l.s4 1934713408
    %v368 = vunpack.c.0.s8 %v367
    %v369 = vperm.slane %v363, %v368
    %v371 = vunpack.c.l.s4 1934713408
    %v372 = vunpack.c.0.s8 %v371
    %v373 = vperm.slane %v365, %v372
    %v374 = vrot.slane %v345, 4
    %v375 = vsel %vm302, %v374, %v333
    %v376 = vrot.slane %v333, 4
    %v377 = vsel %vm302, %v345, %v376
    %v379 = vunpack.c.l.s4 1934713408
    %v380 = vunpack.c.0.s8 %v379
    %v381 = vperm.slane %v375, %v380
    %v383 = vunpack.c.l.s4 1934713408
    %v384 = vunpack.c.0.s8 %v383
    %v385 = vperm.slane %v377, %v384
    %v386 = vrot.slane %v349, 4
    %v387 = vsel %vm302, %v386, %v337
    %v388 = vrot.slane %v337, 4
    %v389 = vsel %vm302, %v349, %v388
    %v391 = vunpack.c.l.s4 1934713408
    %v392 = vunpack.c.0.s8 %v391
    %v393 = vperm.slane %v387, %v392
    %v395 = vunpack.c.l.s4 1934713408
    %v396 = vunpack.c.0.s8 %v395
    %v397 = vperm.slane %v389, %v396
    %v398 = vrot.slane %v381, 4
    %v399 = vsel %vm302, %v398, %v357
    %v400 = vrot.slane %v357, 4
    %v401 = vsel %vm302, %v381, %v400
    %v402 = vrot.slane %v385, 4
    %v403 = vsel %vm302, %v402, %v361
    %v404 = vrot.slane %v361, 4
    %v405 = vsel %vm302, %v385, %v404
    %v406 = vrot.slane %v393, 4
    %v407 = vsel %vm302, %v406, %v369
    %v408 = vrot.slane %v369, 4
    %v409 = vsel %vm302, %v393, %v408
    %v410 = vrot.slane %v397, 4
    %v411 = vsel %vm302, %v410, %v373
    %v412 = vrot.slane %v373, 4
    %v413 = vsel %vm302, %v397, %v412
    %v414 = vrot.slane %v295, 4
    %v415 = vsel %vm302, %v414, %v293
    %v416 = vrot.slane %v293, 4
    %v417 = vsel %vm302, %v295, %v416
    %v419 = vunpack.c.l.s4 1983009808
    %v420 = vunpack.c.0.s8 %v419
    %v421 = vperm.slane %v415, %v420
    %v423 = vunpack.c.l.s4 1983009808
    %v424 = vunpack.c.0.s8 %v423
    %v425 = vperm.slane %v417, %v424
    %v426 = vrot.slane %v296, 4
    %v427 = vsel %vm302, %v426, %v294
    %v428 = vrot.slane %v294, 4
    %v429 = vsel %vm302, %v296, %v428
    %v431 = vunpack.c.l.s4 1983009808
    %v432 = vunpack.c.0.s8 %v431
    %v433 = vperm.slane %v427, %v432
    %v435 = vunpack.c.l.s4 1983009808
    %v436 = vunpack.c.0.s8 %v435
    %v437 = vperm.slane %v429, %v436
    %v438 = vrot.slane %v299, 4
    %v439 = vsel %vm302, %v438, %v297
    %v440 = vrot.slane %v297, 4
    %v441 = vsel %vm302, %v299, %v440
    %v443 = vunpack.c.l.s4 1983009808
    %v444 = vunpack.c.0.s8 %v443
    %v445 = vperm.slane %v439, %v444
    %v447 = vunpack.c.l.s4 1983009808
    %v448 = vunpack.c.0.s8 %v447
    %v449 = vperm.slane %v441, %v448
    %v450 = vrot.slane %v300, 4
    %v451 = vsel %vm302, %v450, %v298
    %v452 = vrot.slane %v298, 4
    %v453 = vsel %vm302, %v300, %v452
    %v455 = vunpack.c.l.s4 1983009808
    %v456 = vunpack.c.0.s8 %v455
    %v457 = vperm.slane %v451, %v456
    %v459 = vunpack.c.l.s4 1983009808
    %v460 = vunpack.c.0.s8 %v459
    %v461 = vperm.slane %v453, %v460
    %v462 = vrot.slane %v433, 4
    %v463 = vsel %vm302, %v462, %v421
    %v464 = vrot.slane %v421, 4
    %v465 = vsel %vm302, %v433, %v464
    %v467 = vunpack.c.l.s4 1934713408
    %v468 = vunpack.c.0.s8 %v467
    %v469 = vperm.slane %v463, %v468
    %v471 = vunpack.c.l.s4 1934713408
    %v472 = vunpack.c.0.s8 %v471
    %v473 = vperm.slane %v465, %v472
    %v474 = vrot.slane %v437, 4
    %v475 = vsel %vm302, %v474, %v425
    %v476 = vrot.slane %v425, 4
    %v477 = vsel %vm302, %v437, %v476
    %v479 = vunpack.c.l.s4 1934713408
    %v480 = vunpack.c.0.s8 %v479
    %v481 = vperm.slane %v475, %v480
    %v483 = vunpack.c.l.s4 1934713408
    %v484 = vunpack.c.0.s8 %v483
    %v485 = vperm.slane %v477, %v484
    %v486 = vrot.slane %v457, 4
    %v487 = vsel %vm302, %v486, %v445
    %v488 = vrot.slane %v445, 4
    %v489 = vsel %vm302, %v457, %v488
    %v491 = vunpack.c.l.s4 1934713408
    %v492 = vunpack.c.0.s8 %v491
    %v493 = vperm.slane %v487, %v492
    %v495 = vunpack.c.l.s4 1934713408
    %v496 = vunpack.c.0.s8 %v495
    %v497 = vperm.slane %v489, %v496
    %v498 = vrot.slane %v461, 4
    %v499 = vsel %vm302, %v498, %v449
    %v500 = vrot.slane %v449, 4
    %v501 = vsel %vm302, %v461, %v500
    %v503 = vunpack.c.l.s4 1934713408
    %v504 = vunpack.c.0.s8 %v503
    %v505 = vperm.slane %v499, %v504
    %v507 = vunpack.c.l.s4 1934713408
    %v508 = vunpack.c.0.s8 %v507
    %v509 = vperm.slane %v501, %v508
    %v510 = vrot.slane %v493, 4
    %v511 = vsel %vm302, %v510, %v469
    %v512 = vrot.slane %v469, 4
    %v513 = vsel %vm302, %v493, %v512
    %v514 = vrot.slane %v497, 4
    %v515 = vsel %vm302, %v514, %v473
    %v516 = vrot.slane %v473, 4
    %v517 = vsel %vm302, %v497, %v516
    %v518 = vrot.slane %v505, 4
    %v519 = vsel %vm302, %v518, %v481
    %v520 = vrot.slane %v481, 4
    %v521 = vsel %vm302, %v505, %v520
    %v522 = vrot.slane %v509, 4
    %v523 = vsel %vm302, %v522, %v485
    %v524 = vrot.slane %v485, 4
    %v525 = vsel %vm302, %v509, %v524
    %528 = vrot.lane.b32.xlu0 %v401, 2
    %v529 = vpop.permute.xlu0 %528
    %530 = vrot.lane.b32.xlu0 %v513, 2
    %v531 = vpop.permute.xlu0 %530
    %536 = vrot.lane.b32.xlu0 %v403, 4
    %v537 = vpop.permute.xlu0 %536
    %538 = vrot.lane.b32.xlu0 %v515, 4
    %v539 = vpop.permute.xlu0 %538
    %544 = vrot.lane.b32.xlu0 %v405, 6
    %v545 = vpop.permute.xlu0 %544
    %546 = vrot.lane.b32.xlu0 %v517, 6
    %v547 = vpop.permute.xlu0 %546
    %552 = vrot.lane.b32.xlu0 %v407, 8
    %v553 = vpop.permute.xlu0 %552
    %554 = vrot.lane.b32.xlu0 %v519, 8
    %v555 = vpop.permute.xlu0 %554
    %560 = vrot.lane.b32.xlu0 %v409, 10
    %v561 = vpop.permute.xlu0 %560
    %562 = vrot.lane.b32.xlu0 %v521, 10
    %v563 = vpop.permute.xlu0 %562
    %568 = vrot.lane.b32.xlu0 %v411, 12
    %v569 = vpop.permute.xlu0 %568
    %570 = vrot.lane.b32.xlu0 %v523, 12
    %v571 = vpop.permute.xlu0 %570
    %576 = vrot.lane.b32.xlu0 %v413, 14
    %v577 = vpop.permute.xlu0 %576
    %578 = vrot.lane.b32.xlu0 %v525, 14
    %v579 = vpop.permute.xlu0 %578
    %vm582 = vcmask 15360
    %v583 = vsel %vm582, %v399, %v529
    %v584 = vsel %vm582, %v511, %v531
    %vm585 = vcmask 31744
    %v586 = vsel %vm585, %v583, %v537
    %v587 = vsel %vm585, %v584, %v539
    %vm588 = vcmask 48128
    %v589 = vsel %vm588, %v586, %v545
    %v590 = vsel %vm588, %v587, %v547
    %vm591 = vcmask 64512
    %v592 = vsel %vm591, %v589, %v553
    %v593 = vsel %vm591, %v590, %v555
    %vm594 = vcmask 80896
    %v595 = vsel %vm594, %v592, %v561
    %v596 = vsel %vm594, %v593, %v563
    %vm597 = vcmask 97280
    %v598 = vsel %vm597, %v595, %v569
    %v599 = vsel %vm597, %v596, %v571
    %vm600 = vcmask 113664
    %v601 = vsel %vm600, %v598, %v577
    %v602 = vsel %vm600, %v599, %v579
    %v603 = vperm.slane %v56, 0
    %v604 = vlaneseq
    %v605 = vshrl.u32 %v604, 7
    %607 = vset.pattern.permute.xlu0 %v605
    %608 = vperm.xlu0 %607, %v603
    %v609 = vpop.permute.xlu0 %608
    %v610 = vperm.slane %v56, 1
    %v611 = vlaneseq
    %v612 = vshrl.u32 %v611, 7
    %614 = vset.pattern.permute.xlu0 %v612
    %615 = vperm.xlu0 %614, %v610
    %v616 = vpop.permute.xlu0 %615
    %v617 = vperm.slane %v56, 2
    %v618 = vlaneseq
    %v619 = vshrl.u32 %v618, 7
    %621 = vset.pattern.permute.xlu0 %v619
    %622 = vperm.xlu0 %621, %v617
    %v623 = vpop.permute.xlu0 %622
    %v624 = vperm.slane %v56, 3
    %v625 = vlaneseq
    %v626 = vshrl.u32 %v625, 7
    %628 = vset.pattern.permute.xlu0 %v626
    %629 = vperm.xlu0 %628, %v624
    %v630 = vpop.permute.xlu0 %629
    %v631 = vperm.slane %v56, 4
    %v632 = vlaneseq
    %v633 = vshrl.u32 %v632, 7
    %635 = vset.pattern.permute.xlu0 %v633
    %636 = vperm.xlu0 %635, %v631
    %v637 = vpop.permute.xlu0 %636
    %v638 = vperm.slane %v56, 5
    %v639 = vlaneseq
    %v640 = vshrl.u32 %v639, 7
    %642 = vset.pattern.permute.xlu0 %v640
    %643 = vperm.xlu0 %642, %v638
    %v644 = vpop.permute.xlu0 %643
    %v645 = vperm.slane %v56, 6
    %v646 = vlaneseq
    %v647 = vshrl.u32 %v646, 7
    %649 = vset.pattern.permute.xlu0 %v647
    %650 = vperm.xlu0 %649, %v645
    %v651 = vpop.permute.xlu0 %650
    %v652 = vperm.slane %v56, 7
    %v653 = vlaneseq
    %v654 = vshrl.u32 %v653, 7
    %656 = vset.pattern.permute.xlu0 %v654
    %657 = vperm.xlu0 %656, %v652
    %v658 = vpop.permute.xlu0 %657
    %v659 = vperm.slane %v57, 0
    %v660 = vlaneseq
    %v661 = vshrl.u32 %v660, 7
    %663 = vset.pattern.permute.xlu0 %v661
    %664 = vperm.xlu0 %663, %v659
    %v665 = vpop.permute.xlu0 %664
    %v666 = vperm.slane %v57, 1
    %v667 = vlaneseq
    %v668 = vshrl.u32 %v667, 7
    %670 = vset.pattern.permute.xlu0 %v668
    %671 = vperm.xlu0 %670, %v666
    %v672 = vpop.permute.xlu0 %671
    %v673 = vperm.slane %v57, 2
    %v674 = vlaneseq
    %v675 = vshrl.u32 %v674, 7
    %677 = vset.pattern.permute.xlu0 %v675
    %678 = vperm.xlu0 %677, %v673
    %v679 = vpop.permute.xlu0 %678
    %v680 = vperm.slane %v57, 3
    %v681 = vlaneseq
    %v682 = vshrl.u32 %v681, 7
    %684 = vset.pattern.permute.xlu0 %v682
    %685 = vperm.xlu0 %684, %v680
    %v686 = vpop.permute.xlu0 %685
    %v687 = vperm.slane %v57, 4
    %v688 = vlaneseq
    %v689 = vshrl.u32 %v688, 7
    %691 = vset.pattern.permute.xlu0 %v689
    %692 = vperm.xlu0 %691, %v687
    %v693 = vpop.permute.xlu0 %692
    %v694 = vperm.slane %v57, 5
    %v695 = vlaneseq
    %v696 = vshrl.u32 %v695, 7
    %698 = vset.pattern.permute.xlu0 %v696
    %699 = vperm.xlu0 %698, %v694
    %v700 = vpop.permute.xlu0 %699
    %v701 = vperm.slane %v57, 6
    %v702 = vlaneseq
    %v703 = vshrl.u32 %v702, 7
    %705 = vset.pattern.permute.xlu0 %v703
    %706 = vperm.xlu0 %705, %v701
    %v707 = vpop.permute.xlu0 %706
    %v708 = vperm.slane %v57, 7
    %v709 = vlaneseq
    %v710 = vshrl.u32 %v709, 7
    %712 = vset.pattern.permute.xlu0 %v710
    %713 = vperm.xlu0 %712, %v708
    %v714 = vpop.permute.xlu0 %713
    %v715 = vperm.slane %v58, 0
    %v716 = vlaneseq
    %v717 = vshrl.u32 %v716, 7
    %719 = vset.pattern.permute.xlu0 %v717
    %720 = vperm.xlu0 %719, %v715
    %v721 = vpop.permute.xlu0 %720
    %v722 = vperm.slane %v58, 1
    %v723 = vlaneseq
    %v724 = vshrl.u32 %v723, 7
    %726 = vset.pattern.permute.xlu0 %v724
    %727 = vperm.xlu0 %726, %v722
    %v728 = vpop.permute.xlu0 %727
    %v729 = vperm.slane %v58, 2
    %v730 = vlaneseq
    %v731 = vshrl.u32 %v730, 7
    %733 = vset.pattern.permute.xlu0 %v731
    %734 = vperm.xlu0 %733, %v729
    %v735 = vpop.permute.xlu0 %734
    %v736 = vperm.slane %v58, 3
    %v737 = vlaneseq
    %v738 = vshrl.u32 %v737, 7
    %740 = vset.pattern.permute.xlu0 %v738
    %741 = vperm.xlu0 %740, %v736
    %v742 = vpop.permute.xlu0 %741
    %v743 = vperm.slane %v58, 4
    %v744 = vlaneseq
    %v745 = vshrl.u32 %v744, 7
    %747 = vset.pattern.permute.xlu0 %v745
    %748 = vperm.xlu0 %747, %v743
    %v749 = vpop.permute.xlu0 %748
    %v750 = vperm.slane %v58, 5
    %v751 = vlaneseq
    %v752 = vshrl.u32 %v751, 7
    %754 = vset.pattern.permute.xlu0 %v752
    %755 = vperm.xlu0 %754, %v750
    %v756 = vpop.permute.xlu0 %755
    %v757 = vperm.slane %v58, 6
    %v758 = vlaneseq
    %v759 = vshrl.u32 %v758, 7
    %761 = vset.pattern.permute.xlu0 %v759
    %762 = vperm.xlu0 %761, %v757
    %v763 = vpop.permute.xlu0 %762
    %v764 = vperm.slane %v58, 7
    %v765 = vlaneseq
    %v766 = vshrl.u32 %v765, 7
    %768 = vset.pattern.permute.xlu0 %v766
    %769 = vperm.xlu0 %768, %v764
    %v770 = vpop.permute.xlu0 %769
    %v771 = vperm.slane %v59, 0
    %v772 = vlaneseq
    %v773 = vshrl.u32 %v772, 7
    %775 = vset.pattern.permute.xlu0 %v773
    %776 = vperm.xlu0 %775, %v771
    %v777 = vpop.permute.xlu0 %776
    %v778 = vperm.slane %v59, 1
    %v779 = vlaneseq
    %v780 = vshrl.u32 %v779, 7
    %782 = vset.pattern.permute.xlu0 %v780
    %783 = vperm.xlu0 %782, %v778
    %v784 = vpop.permute.xlu0 %783
    %v785 = vperm.slane %v59, 2
    %v786 = vlaneseq
    %v787 = vshrl.u32 %v786, 7
    %789 = vset.pattern.permute.xlu0 %v787
    %790 = vperm.xlu0 %789, %v785
    %v791 = vpop.permute.xlu0 %790
    %v792 = vperm.slane %v59, 3
    %v793 = vlaneseq
    %v794 = vshrl.u32 %v793, 7
    %796 = vset.pattern.permute.xlu0 %v794
    %797 = vperm.xlu0 %796, %v792
    %v798 = vpop.permute.xlu0 %797
    %v799 = vperm.slane %v59, 4
    %v800 = vlaneseq
    %v801 = vshrl.u32 %v800, 7
    %803 = vset.pattern.permute.xlu0 %v801
    %804 = vperm.xlu0 %803, %v799
    %v805 = vpop.permute.xlu0 %804
    %v806 = vperm.slane %v59, 5
    %v807 = vlaneseq
    %v808 = vshrl.u32 %v807, 7
    %810 = vset.pattern.permute.xlu0 %v808
    %811 = vperm.xlu0 %810, %v806
    %v812 = vpop.permute.xlu0 %811
    %v813 = vperm.slane %v59, 6
    %v814 = vlaneseq
    %v815 = vshrl.u32 %v814, 7
    %817 = vset.pattern.permute.xlu0 %v815
    %818 = vperm.xlu0 %817, %v813
    %v819 = vpop.permute.xlu0 %818
    %v820 = vperm.slane %v59, 7
    %v821 = vlaneseq
    %v822 = vshrl.u32 %v821, 7
    %824 = vset.pattern.permute.xlu0 %v822
    %825 = vperm.xlu0 %824, %v820
    %v826 = vpop.permute.xlu0 %825
    %v827 = vsel %vm284, %v609, %v721
    %v828 = vsel %vm284, %v616, %v728
    %v829 = vsel %vm284, %v623, %v735
    %v830 = vsel %vm284, %v630, %v742
    %v831 = vsel %vm284, %v637, %v749
    %v832 = vsel %vm284, %v644, %v756
    %v833 = vsel %vm284, %v651, %v763
    %v834 = vsel %vm284, %v658, %v770
    %v835 = vsel %vm284, %v665, %v777
    %v836 = vsel %vm284, %v672, %v784
    %v837 = vsel %vm284, %v679, %v791
    %v838 = vsel %vm284, %v686, %v798
    %v839 = vsel %vm284, %v693, %v805
    %v840 = vsel %vm284, %v700, %v812
    %v841 = vsel %vm284, %v707, %v819
    %v842 = vsel %vm284, %v714, %v826
    %v843 = vrot.slane %v829, 4
    %v844 = vsel %vm302, %v843, %v827
    %v845 = vrot.slane %v827, 4
    %v846 = vsel %vm302, %v829, %v845
    %v848 = vunpack.c.l.s4 1983009808
    %v849 = vunpack.c.0.s8 %v848
    %v850 = vperm.slane %v844, %v849
    %v852 = vunpack.c.l.s4 1983009808
    %v853 = vunpack.c.0.s8 %v852
    %v854 = vperm.slane %v846, %v853
    %v855 = vrot.slane %v830, 4
    %v856 = vsel %vm302, %v855, %v828
    %v857 = vrot.slane %v828, 4
    %v858 = vsel %vm302, %v830, %v857
    %v860 = vunpack.c.l.s4 1983009808
    %v861 = vunpack.c.0.s8 %v860
    %v862 = vperm.slane %v856, %v861
    %v864 = vunpack.c.l.s4 1983009808
    %v865 = vunpack.c.0.s8 %v864
    %v866 = vperm.slane %v858, %v865
    %v867 = vrot.slane %v833, 4
    %v868 = vsel %vm302, %v867, %v831
    %v869 = vrot.slane %v831, 4
    %v870 = vsel %vm302, %v833, %v869
    %v872 = vunpack.c.l.s4 1983009808
    %v873 = vunpack.c.0.s8 %v872
    %v874 = vperm.slane %v868, %v873
    %v876 = vunpack.c.l.s4 1983009808
    %v877 = vunpack.c.0.s8 %v876
    %v878 = vperm.slane %v870, %v877
    %v879 = vrot.slane %v834, 4
    %v880 = vsel %vm302, %v879, %v832
    %v881 = vrot.slane %v832, 4
    %v882 = vsel %vm302, %v834, %v881
    %v884 = vunpack.c.l.s4 1983009808
    %v885 = vunpack.c.0.s8 %v884
    %v886 = vperm.slane %v880, %v885
    %v888 = vunpack.c.l.s4 1983009808
    %v889 = vunpack.c.0.s8 %v888
    %v890 = vperm.slane %v882, %v889
    %v891 = vrot.slane %v862, 4
    %v892 = vsel %vm302, %v891, %v850
    %v893 = vrot.slane %v850, 4
    %v894 = vsel %vm302, %v862, %v893
    %v896 = vunpack.c.l.s4 1934713408
    %v897 = vunpack.c.0.s8 %v896
    %v898 = vperm.slane %v892, %v897
    %v900 = vunpack.c.l.s4 1934713408
    %v901 = vunpack.c.0.s8 %v900
    %v902 = vperm.slane %v894, %v901
    %v903 = vrot.slane %v866, 4
    %v904 = vsel %vm302, %v903, %v854
    %v905 = vrot.slane %v854, 4
    %v906 = vsel %vm302, %v866, %v905
    %v908 = vunpack.c.l.s4 1934713408
    %v909 = vunpack.c.0.s8 %v908
    %v910 = vperm.slane %v904, %v909
    %v912 = vunpack.c.l.s4 1934713408
    %v913 = vunpack.c.0.s8 %v912
    %v914 = vperm.slane %v906, %v913
    %v915 = vrot.slane %v886, 4
    %v916 = vsel %vm302, %v915, %v874
    %v917 = vrot.slane %v874, 4
    %v918 = vsel %vm302, %v886, %v917
    %v920 = vunpack.c.l.s4 1934713408
    %v921 = vunpack.c.0.s8 %v920
    %v922 = vperm.slane %v916, %v921
    %v924 = vunpack.c.l.s4 1934713408
    %v925 = vunpack.c.0.s8 %v924
    %v926 = vperm.slane %v918, %v925
    %v927 = vrot.slane %v890, 4
    %v928 = vsel %vm302, %v927, %v878
    %v929 = vrot.slane %v878, 4
    %v930 = vsel %vm302, %v890, %v929
    %v932 = vunpack.c.l.s4 1934713408
    %v933 = vunpack.c.0.s8 %v932
    %v934 = vperm.slane %v928, %v933
    %v936 = vunpack.c.l.s4 1934713408
    %v937 = vunpack.c.0.s8 %v936
    %v938 = vperm.slane %v930, %v937
    %v939 = vrot.slane %v922, 4
    %v940 = vsel %vm302, %v939, %v898
    %v941 = vrot.slane %v898, 4
    %v942 = vsel %vm302, %v922, %v941
    %v943 = vrot.slane %v926, 4
    %v944 = vsel %vm302, %v943, %v902
    %v945 = vrot.slane %v902, 4
    %v946 = vsel %vm302, %v926, %v945
    %v947 = vrot.slane %v934, 4
    %v948 = vsel %vm302, %v947, %v910
    %v949 = vrot.slane %v910, 4
    %v950 = vsel %vm302, %v934, %v949
    %v951 = vrot.slane %v938, 4
    %v952 = vsel %vm302, %v951, %v914
    %v953 = vrot.slane %v914, 4
    %v954 = vsel %vm302, %v938, %v953
    %v955 = vrot.slane %v837, 4
    %v956 = vsel %vm302, %v955, %v835
    %v957 = vrot.slane %v835, 4
    %v958 = vsel %vm302, %v837, %v957
    %v960 = vunpack.c.l.s4 1983009808
    %v961 = vunpack.c.0.s8 %v960
    %v962 = vperm.slane %v956, %v961
    %v964 = vunpack.c.l.s4 1983009808
    %v965 = vunpack.c.0.s8 %v964
    %v966 = vperm.slane %v958, %v965
    %v967 = vrot.slane %v838, 4
    %v968 = vsel %vm302, %v967, %v836
    %v969 = vrot.slane %v836, 4
    %v970 = vsel %vm302, %v838, %v969
    %v972 = vunpack.c.l.s4 1983009808
    %v973 = vunpack.c.0.s8 %v972
    %v974 = vperm.slane %v968, %v973
    %v976 = vunpack.c.l.s4 1983009808
    %v977 = vunpack.c.0.s8 %v976
    %v978 = vperm.slane %v970, %v977
    %v979 = vrot.slane %v841, 4
    %v980 = vsel %vm302, %v979, %v839
    %v981 = vrot.slane %v839, 4
    %v982 = vsel %vm302, %v841, %v981
    %v984 = vunpack.c.l.s4 1983009808
    %v985 = vunpack.c.0.s8 %v984
    %v986 = vperm.slane %v980, %v985
    %v988 = vunpack.c.l.s4 1983009808
    %v989 = vunpack.c.0.s8 %v988
    %v990 = vperm.slane %v982, %v989
    %v991 = vrot.slane %v842, 4
    %v992 = vsel %vm302, %v991, %v840
    %v993 = vrot.slane %v840, 4
    %v994 = vsel %vm302, %v842, %v993
    %v996 = vunpack.c.l.s4 1983009808
    %v997 = vunpack.c.0.s8 %v996
    %v998 = vperm.slane %v992, %v997
    %v1000 = vunpack.c.l.s4 1983009808
    %v1001 = vunpack.c.0.s8 %v1000
    %v1002 = vperm.slane %v994, %v1001
    %v1003 = vrot.slane %v974, 4
    %v1004 = vsel %vm302, %v1003, %v962
    %v1005 = vrot.slane %v962, 4
    %v1006 = vsel %vm302, %v974, %v1005
    %v1008 = vunpack.c.l.s4 1934713408
    %v1009 = vunpack.c.0.s8 %v1008
    %v1010 = vperm.slane %v1004, %v1009
    %v1012 = vunpack.c.l.s4 1934713408
    %v1013 = vunpack.c.0.s8 %v1012
    %v1014 = vperm.slane %v1006, %v1013
    %v1015 = vrot.slane %v978, 4
    %v1016 = vsel %vm302, %v1015, %v966
    %v1017 = vrot.slane %v966, 4
    %v1018 = vsel %vm302, %v978, %v1017
    %v1020 = vunpack.c.l.s4 1934713408
    %v1021 = vunpack.c.0.s8 %v1020
    %v1022 = vperm.slane %v1016, %v1021
    %v1024 = vunpack.c.l.s4 1934713408
    %v1025 = vunpack.c.0.s8 %v1024
    %v1026 = vperm.slane %v1018, %v1025
    %v1027 = vrot.slane %v998, 4
    %v1028 = vsel %vm302, %v1027, %v986
    %v1029 = vrot.slane %v986, 4
    %v1030 = vsel %vm302, %v998, %v1029
    %v1032 = vunpack.c.l.s4 1934713408
    %v1033 = vunpack.c.0.s8 %v1032
    %v1034 = vperm.slane %v1028, %v1033
    %v1036 = vunpack.c.l.s4 1934713408
    %v1037 = vunpack.c.0.s8 %v1036
    %v1038 = vperm.slane %v1030, %v1037
    %v1039 = vrot.slane %v1002, 4
    %v1040 = vsel %vm302, %v1039, %v990
    %v1041 = vrot.slane %v990, 4
    %v1042 = vsel %vm302, %v1002, %v1041
    %v1044 = vunpack.c.l.s4 1934713408
    %v1045 = vunpack.c.0.s8 %v1044
    %v1046 = vperm.slane %v1040, %v1045
    %v1048 = vunpack.c.l.s4 1934713408
    %v1049 = vunpack.c.0.s8 %v1048
    %v1050 = vperm.slane %v1042, %v1049
    %v1051 = vrot.slane %v1034, 4
    %v1052 = vsel %vm302, %v1051, %v1010
    %v1053 = vrot.slane %v1010, 4
    %v1054 = vsel %vm302, %v1034, %v1053
    %v1055 = vrot.slane %v1038, 4
    %v1056 = vsel %vm302, %v1055, %v1014
    %v1057 = vrot.slane %v1014, 4
    %v1058 = vsel %vm302, %v1038, %v1057
    %v1059 = vrot.slane %v1046, 4
    %v1060 = vsel %vm302, %v1059, %v1022
    %v1061 = vrot.slane %v1022, 4
    %v1062 = vsel %vm302, %v1046, %v1061
    %v1063 = vrot.slane %v1050, 4
    %v1064 = vsel %vm302, %v1063, %v1026
    %v1065 = vrot.slane %v1026, 4
    %v1066 = vsel %vm302, %v1050, %v1065
    %1069 = vrot.lane.b32.xlu0 %v942, 2
    %v1070 = vpop.permute.xlu0 %1069
    %1071 = vrot.lane.b32.xlu0 %v1054, 2
    %v1072 = vpop.permute.xlu0 %1071
    %1077 = vrot.lane.b32.xlu0 %v944, 4
    %v1078 = vpop.permute.xlu0 %1077
    %1079 = vrot.lane.b32.xlu0 %v1056, 4
    %v1080 = vpop.permute.xlu0 %1079
    %1085 = vrot.lane.b32.xlu0 %v946, 6
    %v1086 = vpop.permute.xlu0 %1085
    %1087 = vrot.lane.b32.xlu0 %v1058, 6
    %v1088 = vpop.permute.xlu0 %1087
    %1093 = vrot.lane.b32.xlu0 %v948, 8
    %v1094 = vpop.permute.xlu0 %1093
    %1095 = vrot.lane.b32.xlu0 %v1060, 8
    %v1096 = vpop.permute.xlu0 %1095
    %1101 = vrot.lane.b32.xlu0 %v950, 10
    %v1102 = vpop.permute.xlu0 %1101
    %1103 = vrot.lane.b32.xlu0 %v1062, 10
    %v1104 = vpop.permute.xlu0 %1103
    %1109 = vrot.lane.b32.xlu0 %v952, 12
    %v1110 = vpop.permute.xlu0 %1109
    %1111 = vrot.lane.b32.xlu0 %v1064, 12
    %v1112 = vpop.permute.xlu0 %1111
    %1117 = vrot.lane.b32.xlu0 %v954, 14
    %v1118 = vpop.permute.xlu0 %1117
    %1119 = vrot.lane.b32.xlu0 %v1066, 14
    %v1120 = vpop.permute.xlu0 %1119
    %v1123 = vsel %vm582, %v940, %v1070
    %v1124 = vsel %vm582, %v1052, %v1072
    %v1125 = vsel %vm585, %v1123, %v1078
    %v1126 = vsel %vm585, %v1124, %v1080
    %v1127 = vsel %vm588, %v1125, %v1086
    %v1128 = vsel %vm588, %v1126, %v1088
    %v1129 = vsel %vm591, %v1127, %v1094
    %v1130 = vsel %vm591, %v1128, %v1096
    %v1131 = vsel %vm594, %v1129, %v1102
    %v1132 = vsel %vm594, %v1130, %v1104
    %v1133 = vsel %vm597, %v1131, %v1110
    %v1134 = vsel %vm597, %v1132, %v1112
    %v1135 = vsel %vm600, %v1133, %v1118
    %v1136 = vsel %vm600, %v1134, %v1120
    %1139 = vrot.lane.b32.xlu0 %v1135, 16
    %v1140 = vpop.permute.xlu0 %1139
    %1141 = vrot.lane.b32.xlu0 %v1136, 16
    %v1142 = vpop.permute.xlu0 %1141
    %vm1145 = vcmask 130048
    %v1146 = vsel %vm1145, %v601, %v1140
    %v1147 = vsel %vm1145, %v602, %v1142
    %vm1148 = vcmask 261120
    %1149 = vst.msk [vmem:[#allocation5] sm:$0xff] %vm1148, %v1146
    %1150 = vst.msk [vmem:[#allocation5 + $0x8] sm:$0xff] %vm1148, %v1147
    // Predicated region
    $region10: #{tpu_custom_call.1} parent=1 // pred_check
      _
    $region11: #{tpu_custom_call.1} parent=1 // pred_check_branch
      %1152 = sbr.rel (0) target = $region13
    $region12: #{tpu_custom_call.1} parent=1 // pred_region
      %1154 = vsyncadd [#allocation4], 0
      %s1155 = sshll.u32 [#allocation5], 4
      %s1156 = int_to_ptr.vmem [resolvable:$true] %s1155
      %s1157 = sshll.u32 %s1, 4
      %s1158 = int_to_ptr.hbm [resolvable:$true] %s1157
      %1163 = dma.vmem_to_hbm [thread:$0]  %s1156, 256, %s1158, [#allocation4], 128, 128, 8
    $region13: #{tpu_custom_call.1} parent=1 // pred_fallthru
      _
    // Predicated region
    $region14: #{tpu_custom_call.1} parent=1 // pred_check
      _
    $region15: #{tpu_custom_call.1} parent=1 // pred_check_branch
      %1165 = sbr.rel (0) target = $region17
    $region16: #{tpu_custom_call.1} parent=1 // pred_region
      %1167 = dma.done [#allocation4], 256
    $region17: #{tpu_custom_call.1} parent=1 // pred_fallthru
      _
    %1168 = vsyncpa [#allocation3], 1
    %1169 = vsyncpa [#allocation4], 1

// kernel: tpu_custom_call.1
$region0: #{tpu_custom_call.1}
  #allocation0 [shape = 'u32[]', space=smem, size = 0x4, offset = 0x4, fixed_abs, tag = 'smem constant byte address 0x4 - core index']
  #allocation1 [shape = 'u32[72,128]{1,0:T(1,128)}', space=vmem, size = 0x9000, scoped, tag = 'internal scratch']
  %s0 = inlined_call_operand.hbm [shape: f32[2,4,4,16,16], index: 0, kind: input, shape index: {}]
  %s1 = inlined_call_operand.hbm [shape: f32[2,4,16,64], index: 1, kind: output, shape index: {}]
  %s2 = sld [smem:[#allocation0]]
  $region41: #{tpu_custom_call.1} parent=0
    _
  %s4 = ssub.s32 1, %s2
  %s5 = scalar_select 0, %s4, %s2
  $region1: #{tpu_custom_call.1} parent=0
    #allocation2 [shape = 'u8[262144]{0}', space=vmem, size = 0x40000, scoped, tag = 'input window, operand 0']
    #allocation3 [shape = 's32[2]{0}', space=sflag, size = 0x8, scoped, tag = 'scoped memory for tpu_custom_call.1']
    #allocation4 [shape = 's32[2]{0}', space=sflag, size = 0x8, scoped, tag = 'scoped memory for tpu_custom_call.1']
    #allocation5 [shape = 'u8[65536]{0}', space=vmem, size = 0x10000, scoped, tag = 'output window, operand 0']
    %6 = vsyncpa [#allocation3], 0
    %s7 = scalar_lea.sflag [#allocation3], 1
    %8 = vsyncpa %s7, 0
    %9 = vsyncpa [#allocation4], 0
    %s10 = scalar_lea.sflag [#allocation4], 1
    %11 = vsyncpa %s10, 0
    loop: start=0, step=1, limit=4
    $region2: #{tpu_custom_call.1} parent=1 // loop_pre_header
      _
    $region3: #{tpu_custom_call.1} parent=1 // loop_header
      %s13 = sphi 0, %s17
      %p14 = scmp.ge.s32.totalorder %s13, 4
      %s20 = sphi 0, %s39
      %s21 = sphi 0, %s35
      %s22 = sphi 0, %s31
      %s23 = sphi 0, %s20
      %s24 = sphi 0, %s21
      %s25 = sphi 0, %s22
      %s26 = sphi 0, %s23
      %s27 = sphi 0, %s24
      %s28 = sphi 0, %s25
      %s46 = sphi 0, %s48
      %s49 = sphi 0, %s46
      %s50 = sphi 0, %s49
      %s66 = sphi 0, %s50
      %s76 = sphi 0, %s78
      %s79 = sphi 0, %s76
      %s80 = sphi 0, %s79
      %s96 = sphi 0, %s80
    $region4: #{tpu_custom_call.1} parent=1 // loop_header_branch
      %16 = sbr.rel (%p14) target = $region8
    $region5: #{tpu_custom_call.1} parent=1 // loop_body
      %s18 = ssub.s32 %s13, 1
      %s19 = ssub.s32 %s13, 2
      %s29 = sadd.s32 1, %s22
      %p30 = scmp.ge.s32.totalorder %s29, 1
      %s31 = scalar_select %p30, 0, %s29
      %s32 = sadd.s32 1, %s21
      %s33 = scalar_select %p30, %s32, %s21
      %p34 = scmp.ge.s32.totalorder %s33, 1
      %s35 = scalar_select %p34, 0, %s33
      %s36 = sadd.s32 1, %s20
      %s37 = scalar_select %p34, %s36, %s20
      %p38 = scmp.ge.s32.totalorder %s37, 2
      %s39 = scalar_select %p38, 0, %s37
      %s40 = ssub.s32 %s20, %s39
      %s41 = ssub.s32 %s21, %s35
      %s42 = sor.u32 %s40, %s41
      %s43 = ssub.s32 %s22, %s31
      %s44 = sor.u32 %s42, %s43
      %p45 = scmp.eq.s32.totalorder %s44, 0
      %s47 = sadd.s32 %s46, 1
      %s48 = scalar_select %p45, %s46, %s47
      %p51 = pneg %p45
      %p52 = scmp.eq.s32.totalorder %s13, 1
      %p53 = por %p51, %p52
      %p54 = scmp.ne.s32.totalorder %s46, %s49
      %p55 = scmp.eq.s32.totalorder %s13, 0
      %p56 = por %p54, %p55
      %p57 = scmp.ne.s32.totalorder %s46, %s49
      %p58 = scmp.eq.s32.totalorder %s18, 1
      %p59 = por %p57, %p58
      %p60 = scmp.ne.s32.totalorder %s49, %s50
      %p61 = scmp.eq.s32.totalorder %s18, 0
      %p62 = por %p60, %p61
      %p63 = scmp.ne.s32.totalorder %s49, %s50
      %p64 = scmp.eq.s32.totalorder %s19, 1
      %p65 = por %p63, %p64
      %p67 = scmp.ne.s32.totalorder %s50, %s66
      %p68 = scmp.eq.s32.totalorder %s19, 0
      %p69 = por %p67, %p68
      %s70 = ssub.s32 %s20, %s39
      %s71 = ssub.s32 %s21, %s35
      %s72 = sor.u32 %s70, %s71
      %s73 = ssub.s32 %s22, %s31
      %s74 = sor.u32 %s72, %s73
      %p75 = scmp.eq.s32.totalorder %s74, 0
      %s77 = sadd.s32 %s76, 1
      %s78 = scalar_select %p75, %s76, %s77
      %p81 = pneg %p75
      %p82 = scmp.eq.s32.totalorder %s13, 1
      %p83 = por %p81, %p82
      %p84 = scmp.ne.s32.totalorder %s76, %s79
      %p85 = scmp.eq.s32.totalorder %s13, 0
      %p86 = por %p84, %p85
      %p87 = scmp.ne.s32.totalorder %s76, %s79
      %p88 = scmp.eq.s32.totalorder %s18, 1
      %p89 = por %p87, %p88
      %p90 = scmp.ne.s32.totalorder %s79, %s80
      %p91 = scmp.eq.s32.totalorder %s18, 0
      %p92 = por %p90, %p91
      %p93 = scmp.ne.s32.totalorder %s79, %s80
      %p94 = scmp.eq.s32.totalorder %s19, 1
      %p95 = por %p93, %p94
      %p97 = scmp.ne.s32.totalorder %s80, %s96
      %p98 = scmp.eq.s32.totalorder %s19, 0
      %p99 = por %p97, %p98
      %p100 = scmp.le.s32.totalorder 1, %s13
      %p101 = scmp.lt.s32.totalorder %s13, 3
      %p102 = pnand %p100, %p101
      %p103 = pneg %p102
      // Predicated region
      $region9: #{tpu_custom_call.1} parent=5 // pred_check
        _
      $region10: #{tpu_custom_call.1} parent=5 // pred_check_branch
        %105 = sbr.rel (%p102) target = $region12
      $region11: #{tpu_custom_call.1} parent=5 // pred_region
        %s106 = ssub.s32 %s13, 1
      $region12: #{tpu_custom_call.1} parent=5 // pred_fallthru
        _
      %p107 = scmp.lt.s32.totalorder %s13, 2
      // Predicated region
      $region13: #{tpu_custom_call.1} parent=5 // pred_check
        %p108 = pneg %p107
      $region14: #{tpu_custom_call.1} parent=5 // pred_check_branch
        %110 = sbr.rel (%p108) target = $region16
      $region15: #{tpu_custom_call.1} parent=5 // pred_region
        // Predicated region
        $region17: #{tpu_custom_call.1} parent=15 // pred_check
          %p111 = pneg %p56
        $region18: #{tpu_custom_call.1} parent=15 // pred_check_branch
          %113 = sbr.rel (%p111) target = $region20
        $region19: #{tpu_custom_call.1} parent=15 // pred_region
          %s114 = sand.u32 %s46, 1
          %s115 = scalar_lea.sflag [#allocation3], %s114
          %s116 = sand.u32 %s46, 1
          %s117 = smul.addr %s116, 256
          %s118 = scalar_lea.vmem [#allocation2], %s117
          %s119 = smul.u32 4, %s21
          %s120 = smul.u32 2, %s22
          %122 = vsyncadd %s115, 0
          %s123 = smul.addr %s119, 2
          %s124 = sadd.s32 %s120, %s123
          %s125 = smul.addr %s20, 32
          %s126 = sadd.s32 %s124, %s125
          %s127 = smul.addr %s126, 8
          %s128 = scalar_lea.hbm %s0, %s127
          %s129 = sshll.u32 %s128, 4
          %s130 = int_to_ptr.hbm [resolvable:$true] %s129
          %s131 = sshll.u32 %s118, 4
          %s132 = int_to_ptr.vmem [resolvable:$true] %s131
          %137 = dma.hbm_to_vmem [thread:$0]  %s130, 4096, %s132, %s115, 128, 128, 8
        $region20: #{tpu_custom_call.1} parent=15 // pred_fallthru
          _
      $region16: #{tpu_custom_call.1} parent=5 // pred_fallthru
        _
      %p138 = scmp.le.s32.totalorder 1, %s13
      %p139 = scmp.lt.s32.totalorder %s13, 3
      %p140 = pnand %p138, %p139
      %p141 = pneg %p140
      // Predicated region
      $region21: #{tpu_custom_call.1} parent=5 // pred_check
        _
      $region22: #{tpu_custom_call.1} parent=5 // pred_check_branch
        %143 = sbr.rel (%p140) target = $region24
      $region23: #{tpu_custom_call.1} parent=5 // pred_region
        %s144 = ssub.s32 %s13, 1
        %s145 = sand.u32 %s49, 1
        %s146 = scalar_lea.sflag [#allocation3], %s145
        %s147 = sand.u32 %s49, 1
        %s148 = smul.addr %s147, 256
        %s149 = scalar_lea.vmem [#allocation2], %s148
        // Predicated region
        $region25: #{tpu_custom_call.1} parent=23 // pred_check
          %p150 = pneg %p62
        $region26: #{tpu_custom_call.1} parent=23 // pred_check_branch
          %152 = sbr.rel (%p150) target = $region28
        $region27: #{tpu_custom_call.1} parent=23 // pred_region
          %154 = dma.done %s146, 4096
        $region28: #{tpu_custom_call.1} parent=23 // pred_fallthru
          _
        %s155 = sand.u32 %s49, 1
        %s156 = scalar_lea.sflag [#allocation3], %s155
        %s157 = sand.u32 %s49, 1
        %s158 = smul.addr %s157, 256
        %s159 = scalar_lea.vmem [#allocation2], %s158
        %p160 = pneg %p62
        %p161 = pneg %p59
        %p162 = pneg %p92
        %p163 = pneg %p89
        %s164 = sand.u32 %s79, 1
        %s165 = scalar_lea.sflag [#allocation4], %s164
        %s166 = sand.u32 %s79, 1
        %s167 = smul.addr %s166, 64
        %s168 = scalar_lea.vmem [#allocation5], %s167
        %s169 = smul.u32 4, %s24
        %s170 = smul.u32 2, %s25
        %s171 = smul.u32 4, %s24
        %s172 = smul.u32 2, %s25
        %v173 = vld [vmem:[%s149] sm:$0xff]
        %v174 = vld [vmem:[%s149 + $0x8] sm:$0xff]
        %v175 = vld [vmem:[%s149 + $0x10] sm:$0xff]
        %v176 = vld [vmem:[%s149 + $0x18] sm:$0xff]
        %v177 = vld [vmem:[%s149 + $0x20] sm:$0xff]
        %v178 = vld [vmem:[%s149 + $0x28] sm:$0xff]
        %v179 = vld [vmem:[%s149 + $0x30] sm:$0xff]
        %v180 = vld [vmem:[%s149 + $0x38] sm:$0xff]
        %s181 = scalar_lea.vmem %s149, 64 [#allocation2]
        %v182 = vld [vmem:[%s181] sm:$0xff]
        %v183 = vld [vmem:[%s181 + $0x8] sm:$0xff]
        %v184 = vld [vmem:[%s181 + $0x10] sm:$0xff]
        %v185 = vld [vmem:[%s181 + $0x18] sm:$0xff]
        %v186 = vld [vmem:[%s181 + $0x20] sm:$0xff]
        %v187 = vld [vmem:[%s181 + $0x28] sm:$0xff]
        %v188 = vld [vmem:[%s181 + $0x30] sm:$0xff]
        %v189 = vld [vmem:[%s181 + $0x38] sm:$0xff]
        %s190 = scalar_lea.vmem %s149, 128 [#allocation2]
        %v191 = vld [vmem:[%s190] sm:$0xff]
        %v192 = vld [vmem:[%s190 + $0x8] sm:$0xff]
        %v193 = vld [vmem:[%s190 + $0x10] sm:$0xff]
        %v194 = vld [vmem:[%s190 + $0x18] sm:$0xff]
        %v195 = vld [vmem:[%s190 + $0x20] sm:$0xff]
        %v196 = vld [vmem:[%s190 + $0x28] sm:$0xff]
        %v197 = vld [vmem:[%s190 + $0x30] sm:$0xff]
        %v198 = vld [vmem:[%s190 + $0x38] sm:$0xff]
        %s199 = scalar_lea.vmem %s149, 192 [#allocation2]
        %v200 = vld [vmem:[%s199] sm:$0xff]
        %v201 = vld [vmem:[%s199 + $0x8] sm:$0xff]
        %v202 = vld [vmem:[%s199 + $0x10] sm:$0xff]
        %v203 = vld [vmem:[%s199 + $0x18] sm:$0xff]
        %v204 = vld [vmem:[%s199 + $0x20] sm:$0xff]
        %v205 = vld [vmem:[%s199 + $0x28] sm:$0xff]
        %v206 = vld [vmem:[%s199 + $0x30] sm:$0xff]
        %v207 = vld [vmem:[%s199 + $0x38] sm:$0xff]
        %v208 = vadd.f32 %v173, %v191
        %v209 = vadd.f32 %v174, %v192
        %v210 = vadd.f32 %v175, %v193
        %v211 = vadd.f32 %v176, %v194
        %v212 = vadd.f32 %v177, %v195
        %v213 = vadd.f32 %v178, %v196
        %v214 = vadd.f32 %v179, %v197
        %v215 = vadd.f32 %v180, %v198
        %v216 = vmul.f32 %v208, 0.5
        %v217 = vmul.f32 %v209, 0.5
        %v218 = vmul.f32 %v210, 0.5
        %v219 = vmul.f32 %v211, 0.5
        %v220 = vmul.f32 %v212, 0.5
        %v221 = vmul.f32 %v213, 0.5
        %v222 = vmul.f32 %v214, 0.5
        %v223 = vmul.f32 %v215, 0.5
        %v224 = vadd.f32 %v182, %v200
        %v225 = vadd.f32 %v183, %v201
        %v226 = vadd.f32 %v184, %v202
        %v227 = vadd.f32 %v185, %v203
        %v228 = vadd.f32 %v186, %v204
        %v229 = vadd.f32 %v187, %v205
        %v230 = vadd.f32 %v188, %v206
        %v231 = vadd.f32 %v189, %v207
        %v232 = vmul.f32 %v224, 0.5
        %v233 = vmul.f32 %v225, 0.5
        %v234 = vmul.f32 %v226, 0.5
        %v235 = vmul.f32 %v227, 0.5
        %v236 = vmul.f32 %v228, 0.5
        %v237 = vmul.f32 %v229, 0.5
        %v238 = vmul.f32 %v230, 0.5
        %v239 = vmul.f32 %v231, 0.5
        %v240 = vsub.f32 %v173, %v191
        %v241 = vsub.f32 %v174, %v192
        %v242 = vsub.f32 %v175, %v193
        %v243 = vsub.f32 %v176, %v194
        %v244 = vsub.f32 %v177, %v195
        %v245 = vsub.f32 %v178, %v196
        %v246 = vsub.f32 %v179, %v197
        %v247 = vsub.f32 %v180, %v198
        %v248 = vmul.f32 %v240, 0.5
        %v249 = vmul.f32 %v241, 0.5
        %v250 = vmul.f32 %v242, 0.5
        %v251 = vmul.f32 %v243, 0.5
        %v252 = vmul.f32 %v244, 0.5
        %v253 = vmul.f32 %v245, 0.5
        %v254 = vmul.f32 %v246, 0.5
        %v255 = vmul.f32 %v247, 0.5
        %v256 = vsub.f32 %v182, %v200
        %v257 = vsub.f32 %v183, %v201
        %v258 = vsub.f32 %v184, %v202
        %v259 = vsub.f32 %v185, %v203
        %v260 = vsub.f32 %v186, %v204
        %v261 = vsub.f32 %v187, %v205
        %v262 = vsub.f32 %v188, %v206
        %v263 = vsub.f32 %v189, %v207
        %v264 = vmul.f32 %v256, 0.5
        %v265 = vmul.f32 %v257, 0.5
        %v266 = vmul.f32 %v258, 0.5
        %v267 = vmul.f32 %v259, 0.5
        %v268 = vmul.f32 %v260, 0.5
        %v269 = vmul.f32 %v261, 0.5
        %v270 = vmul.f32 %v262, 0.5
        %v271 = vmul.f32 %v263, 0.5
        %v272 = vsub.f32 %v248, %v264
        %v273 = vsub.f32 %v249, %v265
        %v274 = vsub.f32 %v250, %v266
        %v275 = vsub.f32 %v251, %v267
        %v276 = vsub.f32 %v252, %v268
        %v277 = vsub.f32 %v253, %v269
        %v278 = vsub.f32 %v254, %v270
        %v279 = vsub.f32 %v255, %v271
        %v280 = vadd.f32 %v248, %v264
        %v281 = vadd.f32 %v249, %v265
        %v282 = vadd.f32 %v250, %v266
        %v283 = vadd.f32 %v251, %v267
        %v284 = vadd.f32 %v252, %v268
        %v285 = vadd.f32 %v253, %v269
        %v286 = vadd.f32 %v254, %v270
        %v287 = vadd.f32 %v255, %v271
        %v288 = vsub.f32 %v216, %v232
        %v289 = vsub.f32 %v217, %v233
        %v290 = vsub.f32 %v218, %v234
        %v291 = vsub.f32 %v219, %v235
        %v292 = vsub.f32 %v220, %v236
        %v293 = vsub.f32 %v221, %v237
        %v294 = vsub.f32 %v222, %v238
        %v295 = vsub.f32 %v223, %v239
        %v296 = vadd.f32 %v216, %v232
        %v297 = vadd.f32 %v217, %v233
        %v298 = vadd.f32 %v218, %v234
        %v299 = vadd.f32 %v219, %v235
        %v300 = vadd.f32 %v220, %v236
        %v301 = vadd.f32 %v221, %v237
        %v302 = vadd.f32 %v222, %v238
        %v303 = vadd.f32 %v223, %v239
        %312 = vrot.lane.b32.xlu0 %v280, 16
        %v313 = vpop.permute.xlu0 %312
        %314 = vrot.lane.b32.xlu0 %v281, 16
        %v315 = vpop.permute.xlu0 %314
        %316 = vrot.lane.b32.xlu0 %v282, 16
        %v317 = vpop.permute.xlu0 %316
        %318 = vrot.lane.b32.xlu0 %v283, 16
        %v319 = vpop.permute.xlu0 %318
        %320 = vrot.lane.b32.xlu0 %v284, 16
        %v321 = vpop.permute.xlu0 %320
        %322 = vrot.lane.b32.xlu0 %v285, 16
        %v323 = vpop.permute.xlu0 %322
        %324 = vrot.lane.b32.xlu0 %v286, 16
        %v325 = vpop.permute.xlu0 %324
        %326 = vrot.lane.b32.xlu0 %v287, 16
        %v327 = vpop.permute.xlu0 %326
        %344 = vrot.lane.b32.xlu0 %v288, 32
        %v345 = vpop.permute.xlu0 %344
        %346 = vrot.lane.b32.xlu0 %v289, 32
        %v347 = vpop.permute.xlu0 %346
        %348 = vrot.lane.b32.xlu0 %v290, 32
        %v349 = vpop.permute.xlu0 %348
        %350 = vrot.lane.b32.xlu0 %v291, 32
        %v351 = vpop.permute.xlu0 %350
        %352 = vrot.lane.b32.xlu0 %v292, 32
        %v353 = vpop.permute.xlu0 %352
        %354 = vrot.lane.b32.xlu0 %v293, 32
        %v355 = vpop.permute.xlu0 %354
        %356 = vrot.lane.b32.xlu0 %v294, 32
        %v357 = vpop.permute.xlu0 %356
        %358 = vrot.lane.b32.xlu0 %v295, 32
        %v359 = vpop.permute.xlu0 %358
        %376 = vrot.lane.b32.xlu0 %v296, 48
        %v377 = vpop.permute.xlu0 %376
        %378 = vrot.lane.b32.xlu0 %v297, 48
        %v379 = vpop.permute.xlu0 %378
        %380 = vrot.lane.b32.xlu0 %v298, 48
        %v381 = vpop.permute.xlu0 %380
        %382 = vrot.lane.b32.xlu0 %v299, 48
        %v383 = vpop.permute.xlu0 %382
        %384 = vrot.lane.b32.xlu0 %v300, 48
        %v385 = vpop.permute.xlu0 %384
        %386 = vrot.lane.b32.xlu0 %v301, 48
        %v387 = vpop.permute.xlu0 %386
        %388 = vrot.lane.b32.xlu0 %v302, 48
        %v389 = vpop.permute.xlu0 %388
        %390 = vrot.lane.b32.xlu0 %v303, 48
        %v391 = vpop.permute.xlu0 %390
        %vm400 = vcmask 130048
        %v401 = vsel %vm400, %v272, %v313
        %v402 = vsel %vm400, %v273, %v315
        %v403 = vsel %vm400, %v274, %v317
        %v404 = vsel %vm400, %v275, %v319
        %v405 = vsel %vm400, %v276, %v321
        %v406 = vsel %vm400, %v277, %v323
        %v407 = vsel %vm400, %v278, %v325
        %v408 = vsel %vm400, %v279, %v327
        %vm409 = vcmask 261120
        %v410 = vsel %vm409, %v401, %v345
        %v411 = vsel %vm409, %v402, %v347
        %v412 = vsel %vm409, %v403, %v349
        %v413 = vsel %vm409, %v404, %v351
        %v414 = vsel %vm409, %v405, %v353
        %v415 = vsel %vm409, %v406, %v355
        %v416 = vsel %vm409, %v407, %v357
        %v417 = vsel %vm409, %v408, %v359
        %vm418 = vcmask 392192
        %v419 = vsel %vm418, %v410, %v377
        %v420 = vsel %vm418, %v411, %v379
        %v421 = vsel %vm418, %v412, %v381
        %v422 = vsel %vm418, %v413, %v383
        %v423 = vsel %vm418, %v414, %v385
        %v424 = vsel %vm418, %v415, %v387
        %v425 = vsel %vm418, %v416, %v389
        %v426 = vsel %vm418, %v417, %v391
        %vm427 = vcmask 523264
        %428 = vst.msk [vmem:[%s168] sm:$0xff] %vm427, %v419
        %429 = vst.msk [vmem:[%s168 + $0x8] sm:$0xff] %vm427, %v420
        %430 = vst.msk [vmem:[%s168 + $0x10] sm:$0xff] %vm427, %v421
        %431 = vst.msk [vmem:[%s168 + $0x18] sm:$0xff] %vm427, %v422
        %432 = vst.msk [vmem:[%s168 + $0x20] sm:$0xff] %vm427, %v423
        %433 = vst.msk [vmem:[%s168 + $0x28] sm:$0xff] %vm427, %v424
        %434 = vst.msk [vmem:[%s168 + $0x30] sm:$0xff] %vm427, %v425
        %435 = vst.msk [vmem:[%s168 + $0x38] sm:$0xff] %vm427, %v426
        %s436 = sand.u32 %s79, 1
        %s437 = scalar_lea.sflag [#allocation4], %s436
        %s438 = sand.u32 %s79, 1
        %s439 = smul.addr %s438, 64
        %s440 = scalar_lea.vmem [#allocation5], %s439
        // Predicated region
        $region29: #{tpu_custom_call.1} parent=23 // pred_check
          %p441 = pneg %p89
        $region30: #{tpu_custom_call.1} parent=23 // pred_check_branch
          %443 = sbr.rel (%p441) target = $region32
        $region31: #{tpu_custom_call.1} parent=23 // pred_region
          %s444 = smul.u32 4, %s24
          %s445 = smul.u32 2, %s25
          %447 = vsyncadd %s437, 0
          %s448 = smul.addr %s444, 2
          %s449 = sadd.s32 %s445, %s448
          %s450 = smul.addr %s23, 8
          %s451 = sadd.s32 %s449, %s450
          %s452 = smul.addr %s451, 8
          %s453 = scalar_lea.hbm %s1, %s452
          %s454 = sshll.u32 %s440, 4
          %s455 = int_to_ptr.vmem [resolvable:$true] %s454
          %s456 = sshll.u32 %s453, 4
          %s457 = int_to_ptr.hbm [resolvable:$true] %s456
          %462 = dma.vmem_to_hbm [thread:$0]  %s455, 1024, %s457, %s437, 128, 128, 8
        $region32: #{tpu_custom_call.1} parent=23 // pred_fallthru
          _
      $region24: #{tpu_custom_call.1} parent=5 // pred_fallthru
        _
      %p463 = scmp.le.s32.totalorder 2, %s13
      // Predicated region
      $region33: #{tpu_custom_call.1} parent=5 // pred_check
        %p464 = pneg %p463
      $region34: #{tpu_custom_call.1} parent=5 // pred_check_branch
        %466 = sbr.rel (%p464) target = $region36
      $region35: #{tpu_custom_call.1} parent=5 // pred_region
        %s467 = ssub.s32 %s13, 2
        // Predicated region
        $region37: #{tpu_custom_call.1} parent=35 // pred_check
          %p468 = pneg %p95
        $region38: #{tpu_custom_call.1} parent=35 // pred_check_branch
          %470 = sbr.rel (%p468) target = $region40
        $region39: #{tpu_custom_call.1} parent=35 // pred_region
          %s471 = sand.u32 %s80, 1
          %s472 = scalar_lea.sflag [#allocation4], %s471
          %s473 = sand.u32 %s80, 1
          %s474 = smul.addr %s473, 64
          %s475 = scalar_lea.vmem [#allocation5], %s474
          %477 = dma.done %s472, 1024
        $region40: #{tpu_custom_call.1} parent=35 // pred_fallthru
          _
      $region36: #{tpu_custom_call.1} parent=5 // pred_fallthru
        _
    $region6: #{tpu_custom_call.1} parent=1 // loop_footer
      %s17 = sadd.s32 1, %s13
    $region7: #{tpu_custom_call.1} parent=1 // loop_footer_branch
      %12 = sbr.rel target = $region3
    $region8: #{tpu_custom_call.1} parent=1 // loop_exit
      _
    %478 = vsyncpa [#allocation3], 1
    %s479 = scalar_lea.sflag [#allocation3], 1
    %480 = vsyncpa %s479, 1
    %481 = vsyncpa [#allocation4], 1
    %s482 = scalar_lea.sflag [#allocation4], 1
    %483 = vsyncpa %s482, 1

</llo_original>
